<compile_context>
chip_gen: v7x
topology: tpu7x:2x2x1
jax: 0.10.0
libtpu: 0.0.40
codegen_flags: <defaults>
</compile_context>

<pallas_src>
import functools

import jax
import jax.numpy as jnp
from jax import lax
from jax.experimental import pallas as pl
from jax.experimental.pallas import tpu as pltpu

LANES = 128
SUBLANES = 8
TARGET_BLOCK_BYTES = 4 * 1024 * 1024   # per input, per pipeline buffer
MAX_TILE_ROWS = 32768                  # cap (narrow-dtype inputs)
NUM_CORES = 2                          # v7x 2-TC split; serial loop elsewhere


def _specificity_kernel(out_ref, tgt_ref, acc_ref, *, valid_rows, tile_rows,
                        steps_per_core, need_mask):
    c = pl.program_id(0)
    i = pl.program_id(1)

    @pl.when(i == 0)
    def _():
        acc_ref[...] = jnp.zeros_like(acc_ref)

    neg_o = 1.0 - out_ref[...].astype(jnp.float32)
    neg_t = 1.0 - tgt_ref[...].astype(jnp.float32)

    groups = tile_rows // SUBLANES

    def accumulate(o, t):
        prod = o * t
        # (tile_rows, 128) -> (8, 128) with pure VPU adds (sublane grouping is
        # a layout no-op; no cross-lane XLU work in the hot loop).
        acc_ref[0] += jnp.sum(prod.reshape(groups, SUBLANES, LANES), axis=0)
        acc_ref[1] += jnp.sum(t.reshape(groups, SUBLANES, LANES), axis=0)

    if need_mask:
        # Rows remaining from this tile's (unclamped) global start; <= 0 for
        # steps entirely past the array (their DMA index is clamped in the
        # index_map and the mask zeroes their contribution).
        rem = valid_rows - (c * steps_per_core + i) * tile_rows
        is_full = rem >= tile_rows

        @pl.when(is_full)
        def _():
            accumulate(neg_o, neg_t)

        @pl.when(jnp.logical_not(is_full))
        def _():
            row_ids = lax.broadcasted_iota(jnp.int32, (tile_rows, LANES), 0)
            valid = row_ids < rem
            # Mask BOTH operands before the multiply so garbage rows cannot
            # leak into either the numerator or the denominator.
            accumulate(jnp.where(valid, neg_o, 0.0),
                       jnp.where(valid, neg_t, 0.0))
    else:
        accumulate(neg_o, neg_t)


def specificity(output: jax.Array, target: jax.Array) -> jax.Array:
    """Matches SPECIFICITY.forward: scalar float32 result."""
    out_flat = jnp.reshape(output, (-1,))
    tgt_flat = jnp.reshape(target, (-1,))
    n = out_flat.shape[0]

    block_elems = SUBLANES * LANES
    if n < block_elems:
        pad = block_elems - n                     # tiny input: pad to one block
    elif n % LANES:
        # TODO(synk): n not a multiple of 128 forces a full-array pad copy; a
        # manual-DMA tail path would avoid it, but it is rare for this metric.
        pad = LANES - (n % LANES)
    else:
        pad = 0                                   # common case: no copy at all
    if pad:
        out_flat = jnp.pad(out_flat, (0, pad), constant_values=1)
        tgt_flat = jnp.pad(tgt_flat, (0, pad), constant_values=1)

    rows = (n + pad) // LANES
    out2d = out_flat.reshape(rows, LANES)
    tgt2d = tgt_flat.reshape(rows, LANES)

    # Tile sized by bytes (~4 MiB per input per pipeline buffer).
    itemsize = max(out2d.dtype.itemsize, tgt2d.dtype.itemsize)
    target_rows = min(MAX_TILE_ROWS,
                      max(SUBLANES, TARGET_BLOCK_BYTES // (LANES * itemsize)))
    tile_rows = max(SUBLANES, (min(rows, target_rows) // SUBLANES) * SUBLANES)

    total_blocks = pl.cdiv(rows, tile_rows)
    num_cores = NUM_CORES if total_blocks >= 2 else 1
    if num_cores > 1 and total_blocks % num_cores:
        # Shrink the tile so the block count splits evenly across cores
        # (avoids a wasted duplicate-block DMA on the longer core).
        new_tile = pl.cdiv(rows, total_blocks + 1)
        new_tile = ((new_tile + SUBLANES - 1) // SUBLANES) * SUBLANES
        tile_rows = max(SUBLANES, min(tile_rows, new_tile))
        total_blocks = pl.cdiv(rows, tile_rows)
    steps_per_core = pl.cdiv(total_blocks, num_cores)
    last_block = total_blocks - 1
    need_mask = (num_cores * steps_per_core * tile_rows) != rows

    def in_map(c, i):
        # Clamp so steps past the final block never DMA out of bounds (their
        # contribution is masked to zero inside the kernel).
        return (jnp.minimum(c * steps_per_core + i, last_block), 0)

    kernel = functools.partial(
        _specificity_kernel, valid_rows=rows, tile_rows=tile_rows,
        steps_per_core=steps_per_core, need_mask=need_mask)

    bytes_accessed = (rows * LANES *
                      (out2d.dtype.itemsize + tgt2d.dtype.itemsize)
                      + num_cores * 2 * SUBLANES * LANES * 4)

    acc = pl.pallas_call(
        kernel,
        out_shape=jax.ShapeDtypeStruct((num_cores, 2, SUBLANES, LANES),
                                       jnp.float32),
        grid_spec=pltpu.PrefetchScalarGridSpec(
            num_scalar_prefetch=0,
            grid=(num_cores, steps_per_core),
            in_specs=[
                pl.BlockSpec((tile_rows, LANES), in_map),
                pl.BlockSpec((tile_rows, LANES), in_map),
            ],
            out_specs=pl.BlockSpec((None, 2, SUBLANES, LANES),
                                   lambda c, i: (c, 0, 0, 0)),
        ),
        compiler_params=pltpu.CompilerParams(
            dimension_semantics=("parallel", "arbitrary"),
            vmem_limit_bytes=32 * 1024 * 1024,
        ),
        cost_estimate=pl.CostEstimate(
            flops=5 * rows * LANES,
            transcendentals=0,
            bytes_accessed=bytes_accessed,
        ),
    )(out2d, tgt2d)

    num = jnp.sum(acc[:, 0])
    den = jnp.sum(acc[:, 1])
    return (num / den).astype(jnp.float32)


if __name__ == "__main__":
    key = jax.random.PRNGKey(0)
    k1, k2 = jax.random.split(key)
    # NCHW-like segmentation tensors (probabilities / binary masks)
    output = jax.random.uniform(k1, (2, 4, 16, 16), dtype=jnp.float32)
    target = (jax.random.uniform(k2, (2, 4, 16, 16)) > 0.5).astype(jnp.float32)

    result = specificity(output, target)
    jax.block_until_ready(result)

    # reference check in plain JAX
    neg_o = 1.0 - output.reshape(-1)
    neg_t = 1.0 - target.reshape(-1)
    ref = jnp.sum(neg_o * neg_t) / jnp.sum(neg_t)
    assert jnp.allclose(result, ref, rtol=1e-5, atol=1e-6), (result, ref)

    print("KERNEL_OK")
</pallas_src>

<mosaic_0001>
module attributes {stable_mosaic.version = 11 : i64} {
  func.func @_specificity_kernel(%arg0: i32, %arg1: i32, %arg2: memref<16x128xf32, #tpu.memory_space<vmem>>, %arg3: memref<16x128xf32, #tpu.memory_space<vmem>>, %arg4: memref<1x2x8x128xf32, #tpu.memory_space<vmem>>) attributes {dimension_semantics = [#tpu.dimension_semantics<parallel>, #tpu.dimension_semantics<arbitrary>], iteration_bounds = array<i64: 1, 1>, scalar_prefetch = 0 : i64, scratch_operands = 0 : i64, tpu.core_type = #tpu.core_type<tc>, window_params = [{transform_indices = @transform_0, window_bounds = array<i64: 16, 128>}, {transform_indices = @transform_1, window_bounds = array<i64: 16, 128>}, {transform_indices = @transform_2, window_bounds = array<i64: 1, 2, 8, 128>}]} {
    %c0_i32 = arith.constant 0 : i32
    %0 = arith.cmpi eq, %arg1, %c0_i32 : i32
    %1 = arith.extui %0 : i1 to i32
    %c0_i32_0 = arith.constant 0 : i32
    %2 = arith.cmpi ne, %1, %c0_i32_0 : i32
    scf.if %2 {
      %cst_22 = arith.constant 0.000000e+00 : f32
      %26 = vector.broadcast %cst_22 : f32 to vector<2x8x128xf32>
      %c0_23 = arith.constant 0 : index
      %c0_24 = arith.constant 0 : index
      %c0_25 = arith.constant 0 : index
      %c0_26 = arith.constant 0 : index
      %27 = vector.load %arg4[%c0_23, %c0_24, %c0_25, %c0_26] : memref<1x2x8x128xf32, #tpu.memory_space<vmem>>, vector<1x2x8x128xf32>
      %28 = vector.shape_cast %27 : vector<1x2x8x128xf32> to vector<2x8x128xf32>
      %29 = vector.shape_cast %26 : vector<2x8x128xf32> to vector<1x2x8x128xf32>
      tpu.vector_store %arg4[%c0_23, %c0_24, %c0_25, %c0_26], %29 {strides = array<i32>} : memref<1x2x8x128xf32, #tpu.memory_space<vmem>>, vector<1x2x8x128xf32>,
    } else {
    }
    %c0 = arith.constant 0 : index
    %c0_1 = arith.constant 0 : index
    %3 = vector.load %arg2[%c0, %c0_1] : memref<16x128xf32, #tpu.memory_space<vmem>>, vector<16x128xf32>
    %cst = arith.constant 1.000000e+00 : f32
    %4 = vector.broadcast %cst : f32 to vector<16x128xf32>
    %5 = arith.subf %4, %3 : vector<16x128xf32>
    %c0_2 = arith.constant 0 : index
    %c0_3 = arith.constant 0 : index
    %6 = vector.load %arg3[%c0_2, %c0_3] : memref<16x128xf32, #tpu.memory_space<vmem>>, vector<16x128xf32>
    %cst_4 = arith.constant 1.000000e+00 : f32
    %7 = vector.broadcast %cst_4 : f32 to vector<16x128xf32>
    %8 = arith.subf %7, %6 : vector<16x128xf32>
    %9 = arith.mulf %5, %8 : vector<16x128xf32>
    %c0_5 = arith.constant 0 : index
    %c0_6 = arith.constant 0 : index
    %c0_7 = arith.constant 0 : index
    %c0_8 = arith.constant 0 : index
    %10 = vector.load %arg4[%c0_5, %c0_6, %c0_7, %c0_8] : memref<1x2x8x128xf32, #tpu.memory_space<vmem>>, vector<1x1x8x128xf32>
    %11 = vector.shape_cast %10 : vector<1x1x8x128xf32> to vector<8x128xf32>
    %12 = vector.shape_cast %9 : vector<16x128xf32> to vector<2x8x128xf32>
    %cst_9 = arith.constant dense<0.000000e+00> : vector<8x128xf32>
    %13 = vector.multi_reduction <add>, %12, %cst_9 [0] : vector<2x8x128xf32> to vector<8x128xf32>
    %14 = arith.addf %11, %13 : vector<8x128xf32>
    %c0_10 = arith.constant 0 : index
    %c0_11 = arith.constant 0 : index
    %c0_12 = arith.constant 0 : index
    %c0_13 = arith.constant 0 : index
    %15 = vector.load %arg4[%c0_10, %c0_11, %c0_12, %c0_13] : memref<1x2x8x128xf32, #tpu.memory_space<vmem>>, vector<1x1x8x128xf32>
    %16 = vector.shape_cast %15 : vector<1x1x8x128xf32> to vector<8x128xf32>
    %17 = vector.shape_cast %14 : vector<8x128xf32> to vector<1x1x8x128xf32>
    tpu.vector_store %arg4[%c0_10, %c0_11, %c0_12, %c0_13], %17 {strides = array<i32>} : memref<1x2x8x128xf32, #tpu.memory_space<vmem>>, vector<1x1x8x128xf32>,
    %c0_14 = arith.constant 0 : index
    %c1 = arith.constant 1 : index
    %c0_15 = arith.constant 0 : index
    %c0_16 = arith.constant 0 : index
    %18 = vector.load %arg4[%c0_14, %c1, %c0_15, %c0_16] : memref<1x2x8x128xf32, #tpu.memory_space<vmem>>, vector<1x1x8x128xf32>
    %19 = vector.shape_cast %18 : vector<1x1x8x128xf32> to vector<8x128xf32>
    %20 = vector.shape_cast %8 : vector<16x128xf32> to vector<2x8x128xf32>
    %cst_17 = arith.constant dense<0.000000e+00> : vector<8x128xf32>
    %21 = vector.multi_reduction <add>, %20, %cst_17 [0] : vector<2x8x128xf32> to vector<8x128xf32>
    %22 = arith.addf %19, %21 : vector<8x128xf32>
    %c0_18 = arith.constant 0 : index
    %c1_19 = arith.constant 1 : index
    %c0_20 = arith.constant 0 : index
    %c0_21 = arith.constant 0 : index
    %23 = vector.load %arg4[%c0_18, %c1_19, %c0_20, %c0_21] : memref<1x2x8x128xf32, #tpu.memory_space<vmem>>, vector<1x1x8x128xf32>
    %24 = vector.shape_cast %23 : vector<1x1x8x128xf32> to vector<8x128xf32>
    %25 = vector.shape_cast %22 : vector<8x128xf32> to vector<1x1x8x128xf32>
    tpu.vector_store %arg4[%c0_18, %c1_19, %c0_20, %c0_21], %25 {strides = array<i32>} : memref<1x2x8x128xf32, #tpu.memory_space<vmem>>, vector<1x1x8x128xf32>,
    return
  }
  func.func @transform_0(%arg0: i32, %arg1: i32) -> (i32, i32) {
    %c1_i32 = arith.constant 1 : i32
    %0 = arith.muli %arg0, %c1_i32 : i32
    %1 = arith.addi %0, %arg1 : i32
    %c0_i32 = arith.constant 0 : i32
    %2 = arith.minsi %1, %c0_i32 : i32
    %c0_i32_0 = arith.constant 0 : i32
    %c0_i32_1 = arith.constant 0 : i32
    return %2, %c0_i32_0 : i32, i32
  }
  func.func @transform_1(%arg0: i32, %arg1: i32) -> (i32, i32) {
    %c1_i32 = arith.constant 1 : i32
    %0 = arith.muli %arg0, %c1_i32 : i32
    %1 = arith.addi %0, %arg1 : i32
    %c0_i32 = arith.constant 0 : i32
    %2 = arith.minsi %1, %c0_i32 : i32
    %c0_i32_0 = arith.constant 0 : i32
    %c0_i32_1 = arith.constant 0 : i32
    return %2, %c0_i32_0 : i32, i32
  }
  func.func @transform_2(%arg0: i32, %arg1: i32) -> (i32, i32, i32, i32) {
    %c0_i32 = arith.constant 0 : i32
    %c0_i32_0 = arith.constant 0 : i32
    %c0_i32_1 = arith.constant 0 : i32
    %c0_i32_2 = arith.constant 0 : i32
    return %arg0, %c0_i32, %c0_i32_0, %c0_i32_1 : i32, i32, i32, i32
  }
}

</mosaic_0001>

<llo_original>
// kernel: tpu_custom_call.1
$region0: #{tpu_custom_call.1}
  #allocation0 [shape = 'u32[]', space=smem, size = 0x4, offset = 0x4, fixed_abs, tag = 'smem constant byte address 0x4 - core index']
  #allocation1 [shape = 'u32[144,128]{1,0:T(1,128)}', space=vmem, size = 0x12000, scoped, tag = 'internal scratch']
  %s0 = inlined_call_operand.hbm [shape: f32[16,128], index: 0, kind: input, shape index: {}]
  %s1 = inlined_call_operand.hbm [shape: f32[16,128], index: 1, kind: input, shape index: {}]
  %s2 = inlined_call_operand.hbm [shape: f32[1,2,8,128], index: 2, kind: output, shape index: {}]
  %s3 = sld [smem:[#allocation0]]
  $region30: #{tpu_custom_call.1} parent=0
    _
  %s5 = ssub.s32 1, %s3
  %s6 = scalar_select 0, %s5, %s3
  $region1: #{tpu_custom_call.1} parent=0
    #allocation2 [shape = 'u8[8192]{0}', space=vmem, size = 0x2000, scoped, tag = 'input window, operand 0, single buffered']
    #allocation3 [shape = 's32[1]{0}', space=sflag, size = 0x4, scoped, tag = 'scoped memory for tpu_custom_call.1']
    #allocation4 [shape = 's32[1]{0}', space=sflag, size = 0x4, scoped, tag = 'scoped memory for tpu_custom_call.1']
    #allocation5 [shape = 'u8[8192]{0}', space=vmem, size = 0x2000, scoped, tag = 'input window, operand 1, single buffered']
    #allocation6 [shape = 's32[1]{0}', space=sflag, size = 0x4, scoped, tag = 'scoped memory for tpu_custom_call.1']
    #allocation7 [shape = 'u8[8192]{0}', space=vmem, size = 0x2000, scoped, tag = 'output window, operand 0, single buffered']
    %7 = vsyncpa [#allocation3], 0
    %8 = vsyncpa [#allocation6], 0
    %9 = vsyncpa [#allocation4], 0
    // Predicated region
    $region2: #{tpu_custom_call.1} parent=1 // pred_check
      _
    $region3: #{tpu_custom_call.1} parent=1 // pred_check_branch
      %11 = sbr.rel (0) target = $region5
    $region4: #{tpu_custom_call.1} parent=1 // pred_region
      %s12 = sadd.s32 0, 0
      %p13 = scmp.lt.s32.totalorder %s12, 0
      %s14 = scalar_select %p13, %s12, 0
      %s15 = smul.u32 2, %s14
      %s17 = ssub.s32 256, 256
      %18 = vsyncadd [#allocation3], %s17
      %s19 = smul.addr %s15, 128
      %s20 = scalar_lea.hbm %s0, %s19
      %s21 = sshll.u32 [#allocation2], 4
      %s22 = int_to_ptr.vmem [resolvable:$true] %s21
      %27 = dma.hbm_to_vmem [thread:$0]  %s20, 256, %s22, [#allocation3], 128, 128, 8
    $region5: #{tpu_custom_call.1} parent=1 // pred_fallthru
      _
    // Predicated region
    $region6: #{tpu_custom_call.1} parent=1 // pred_check
      _
    $region7: #{tpu_custom_call.1} parent=1 // pred_check_branch
      %29 = sbr.rel (0) target = $region9
    $region8: #{tpu_custom_call.1} parent=1 // pred_region
      %s30 = sadd.s32 0, 0
      %p31 = scmp.lt.s32.totalorder %s30, 0
      %s32 = scalar_select %p31, %s30, 0
      %s33 = smul.u32 2, %s32
      %s35 = ssub.s32 256, 256
      %36 = vsyncadd [#allocation6], %s35
      %s37 = smul.addr %s33, 128
      %s38 = scalar_lea.hbm %s1, %s37
      %s39 = sshll.u32 [#allocation5], 4
      %s40 = int_to_ptr.vmem [resolvable:$true] %s39
      %45 = dma.hbm_to_vmem [thread:$0]  %s38, 256, %s40, [#allocation6], 128, 128, 8
    $region9: #{tpu_custom_call.1} parent=1 // pred_fallthru
      _
    // Predicated region
    $region10: #{tpu_custom_call.1} parent=1 // pred_check
      _
    $region11: #{tpu_custom_call.1} parent=1 // pred_check_branch
      %47 = sbr.rel (0) target = $region13
    $region12: #{tpu_custom_call.1} parent=1 // pred_region
      %48 = dma.done [#allocation3], 256
    $region13: #{tpu_custom_call.1} parent=1 // pred_fallthru
      _
    // Predicated region
    $region14: #{tpu_custom_call.1} parent=1 // pred_check
      _
    $region15: #{tpu_custom_call.1} parent=1 // pred_check_branch
      %50 = sbr.rel (0) target = $region17
    $region16: #{tpu_custom_call.1} parent=1 // pred_region
      %51 = dma.done [#allocation6], 256
    $region17: #{tpu_custom_call.1} parent=1 // pred_fallthru
      _
    %s52 = sadd.s32 0, 0
    %p53 = scmp.lt.s32.totalorder %s52, 0
    %s54 = scalar_select %p53, %s52, 0
    %s55 = smul.u32 2, %s54
    %s56 = sadd.s32 0, 0
    %p57 = scmp.lt.s32.totalorder %s56, 0
    %s58 = scalar_select %p57, %s56, 0
    %s59 = smul.u32 2, %s58
    %p60 = scmp.eq.s32.totalorder 0, 0
    // Predicated region
    $region18: #{tpu_custom_call.1} parent=1 // pred_check
      %p61 = pneg %p60
    $region19: #{tpu_custom_call.1} parent=1 // pred_check_branch
      %63 = sbr.rel (%p61) target = $region21
    $region20: #{tpu_custom_call.1} parent=1 // pred_region
      %64 = vst [vmem:[#allocation7] sm:$0xff] 0.0
      %65 = vst [vmem:[#allocation7 + $0x8] sm:$0xff] 0.0
    $region21: #{tpu_custom_call.1} parent=1 // pred_fallthru
      _
    %v66 = vld [vmem:[#allocation2] sm:$0xff]
    %v67 = vld [vmem:[#allocation2 + $0x8] sm:$0xff]
    %v68 = vsub.f32 1.0, %v66
    %v69 = vsub.f32 1.0, %v67
    %v70 = vld [vmem:[#allocation5] sm:$0xff]
    %v71 = vld [vmem:[#allocation5 + $0x8] sm:$0xff]
    %v72 = vsub.f32 1.0, %v70
    %v73 = vsub.f32 1.0, %v71
    %v74 = vmul.f32 %v68, %v72
    %v75 = vmul.f32 %v69, %v73
    %v76 = vld [vmem:[#allocation7] sm:$0xff]
    %v77 = vadd.f32 %v74, %v75
    %v78 = vadd.f32 %v76, %v77
    %79 = vst [vmem:[#allocation7] sm:$0xff] %v78
    %s80 = scalar_lea.vmem [#allocation7], 8
    %v81 = vld [vmem:[%s80] sm:$0xff]
    %v82 = vadd.f32 %v72, %v73
    %v83 = vadd.f32 %v81, %v82
    %84 = vst [vmem:[%s80] sm:$0xff] %v83
    // Predicated region
    $region22: #{tpu_custom_call.1} parent=1 // pred_check
      _
    $region23: #{tpu_custom_call.1} parent=1 // pred_check_branch
      %86 = sbr.rel (0) target = $region25
    $region24: #{tpu_custom_call.1} parent=1 // pred_region
      %s88 = ssub.s32 256, 256
      %89 = vsyncadd [#allocation4], %s88
      %s90 = sshll.u32 [#allocation7], 4
      %s91 = int_to_ptr.vmem [resolvable:$true] %s90
      %96 = dma.vmem_to_hbm [thread:$0]  %s91, 256, %s2, [#allocation4], 128, 128, 8
    $region25: #{tpu_custom_call.1} parent=1 // pred_fallthru
      _
    // Predicated region
    $region26: #{tpu_custom_call.1} parent=1 // pred_check
      _
    $region27: #{tpu_custom_call.1} parent=1 // pred_check_branch
      %98 = sbr.rel (0) target = $region29
    $region28: #{tpu_custom_call.1} parent=1 // pred_region
      %99 = dma.done [#allocation4], 256
    $region29: #{tpu_custom_call.1} parent=1 // pred_fallthru
      _
    %100 = vsyncpa [#allocation3], 1
    %101 = vsyncpa [#allocation6], 1
    %102 = vsyncpa [#allocation4], 1

</llo_original>
